<compile_context>
chip_gen: v6e
topology: v6e:2x2x1
jax: 0.10.0
libtpu: 0.0.40
codegen_flags: <defaults>
</compile_context>

<pallas_src>
import functools

import jax
import jax.numpy as jnp
from jax.experimental import pallas as pl
from jax.experimental.pallas import tpu as pltpu


# --------------------------- tiling heuristics -----------------------------

def _device_tiling():
    """Generation-aware tile targets and scoped-VMEM limit."""
    try:
        kind = jax.devices()[0].device_kind.lower()
    except Exception:
        kind = ""
    if ("v5 lite" in kind) or ("v5e" in kind) or ("v5lite" in kind):
        # v5e: 16 MiB default scoped VMEM -> raise explicitly; 128-aligned tn.
        return dict(tm=256, tn=512, tk=512, vmem=64 * 1024 * 1024)
    if "v6" in kind:
        # v6e: 128 MiB VMEM -> bigger resident tiles, fewer grid steps.
        return dict(tm=512, tn=1024, tk=512, vmem=96 * 1024 * 1024)
    if "7" in kind:
        # v7x: only 64 MiB physical VMEM -> smaller tiles, explicit limit.
        return dict(tm=256, tn=512, tk=512, vmem=48 * 1024 * 1024)
    return dict(tm=256, tn=512, tk=512, vmem=64 * 1024 * 1024)


def _fit_tile(dim, target, align):
    """Largest multiple of `align` that divides `dim` and is <= `target`.
    Falls back to the full dim (always a legal block shape)."""
    if dim <= target:
        return dim
    t = (target // align) * align
    while t >= align:
        if dim % t == 0:
            return t
        t -= align
    return dim


# --------------------- fused projection + logsumexp kernel -----------------

def _fused_logits_lse_kernel(feat_ref, w_ref, b_ref, logits_ref, lse_ref,
                             acc_ref, m_ref, l_ref):
    """grid = (M/tm, V/tn, D/tk); k innermost (matmul reduction), j middle
    (vocab tiles, online logsumexp), i outermost (rows, megacore-parallel)."""
    j = pl.program_id(1)
    k = pl.program_id(2)
    nj = pl.num_programs(1)
    nk = pl.num_programs(2)

    # reset the per-row online-softmax state at the start of each row tile
    @pl.when((j == 0) & (k == 0))
    def _():
        m_ref[...] = jnp.full_like(m_ref, -jnp.inf)
        l_ref[...] = jnp.zeros_like(l_ref)

    # reset the matmul accumulator at the start of each K sweep
    @pl.when(k == 0)
    def _():
        acc_ref[...] = jnp.zeros_like(acc_ref)

    # bf16 MXU matmul, f32 accumulation
    acc_ref[...] += jnp.dot(feat_ref[...], w_ref[...],
                            preferred_element_type=jnp.float32)

    # epilogue: bias once, store logits tile, online max / sum-exp update
    @pl.when(k == nk - 1)
    def _():
        logits = acc_ref[...] + b_ref[...].astype(jnp.float32)      # (tm, tn)
        logits_ref[...] = logits.astype(logits_ref.dtype)

        tile_max = jnp.max(logits, axis=-1, keepdims=True)          # (tm, 1)
        m_new = jnp.maximum(m_ref[...], tile_max)
        l_ref[...] = (l_ref[...] * jnp.exp(m_ref[...] - m_new)
                      + jnp.sum(jnp.exp(logits - m_new), axis=-1, keepdims=True))
        m_ref[...] = m_new

        @pl.when(j == nj - 1)
        def _():
            lse_ref[...] = (m_ref[...] + jnp.log(l_ref[...])).astype(lse_ref.dtype)


def fused_output_layer(features_2d, w, b, *, logits_dtype=jnp.float32):
    """(M, D) @ (D, V) + (1, V) -> (logits (M, V), lse (M, 1))."""
    M, D = features_2d.shape
    V = w.shape[1]
    cfg = _device_tiling()
    tm = _fit_tile(M, cfg["tm"], 16)    # bf16 sublane packing
    tn = _fit_tile(V, cfg["tn"], 128)   # lane / MXU aligned
    tk = _fit_tile(D, cfg["tk"], 128)

    feat_bf = features_2d.astype(jnp.bfloat16)   # halves A/B DMA, fast MXU
    w_bf = w.astype(jnp.bfloat16)
    b2d = b.reshape(1, V).astype(jnp.float32)

    grid = (M // tm, V // tn, D // tk)
    logits, lse = pl.pallas_call(
        _fused_logits_lse_kernel,
        out_shape=(jax.ShapeDtypeStruct((M, V), logits_dtype),
                   jax.ShapeDtypeStruct((M, 1), jnp.float32)),
        grid_spec=pltpu.PrefetchScalarGridSpec(
            num_scalar_prefetch=0,
            grid=grid,
            in_specs=[
                pl.BlockSpec((tm, tk), lambda i, j, k: (i, k)),
                pl.BlockSpec((tk, tn), lambda i, j, k: (k, j)),
                pl.BlockSpec((1, tn), lambda i, j, k: (0, j)),   # bias, j only
            ],
            out_specs=[
                pl.BlockSpec((tm, tn), lambda i, j, k: (i, j)),  # logits
                pl.BlockSpec((tm, 1), lambda i, j, k: (i, 0)),   # lse
            ],
            scratch_shapes=[
                pltpu.VMEM((tm, tn), jnp.float32),   # matmul accumulator
                pltpu.VMEM((tm, 1), jnp.float32),    # running max
                pltpu.VMEM((tm, 1), jnp.float32),    # running sum-exp
            ]),
        compiler_params=pltpu.CompilerParams(
            dimension_semantics=("parallel", "arbitrary", "arbitrary"),
            vmem_limit_bytes=cfg["vmem"]),
    )(feat_bf, w_bf, b2d)
    return logits, lse


# ---------------------- normalization (uses fused lse) ---------------------

def _normalize_kernel(logits_ref, lse_ref, out_ref, *, want_log):
    x = logits_ref[...].astype(jnp.float32) - lse_ref[...].astype(jnp.float32)
    if not want_log:
        x = jnp.exp(x)
    out_ref[...] = x.astype(out_ref.dtype)


def normalize_from_lse(logits_2d, lse_2d, *, log_probs=True,
                       out_dtype=jnp.float32):
    """Streaming lprobs = logits - lse (no reduction); tiled over (rows, vocab)."""
    M, V = logits_2d.shape
    cfg = _device_tiling()
    tm = _fit_tile(M, cfg["tm"], 8)
    tn = _fit_tile(V, cfg["tn"], 128)
    return pl.pallas_call(
        functools.partial(_normalize_kernel, want_log=log_probs),
        out_shape=jax.ShapeDtypeStruct((M, V), out_dtype),
        grid_spec=pltpu.PrefetchScalarGridSpec(
            num_scalar_prefetch=0,
            grid=(M // tm, V // tn),
            in_specs=[
                pl.BlockSpec((tm, tn), lambda i, j: (i, j)),
                pl.BlockSpec((tm, 1), lambda i, j: (i, 0)),
            ],
            out_specs=pl.BlockSpec((tm, tn), lambda i, j: (i, j))),
        compiler_params=pltpu.CompilerParams(
            dimension_semantics=("parallel", "parallel"),
            vmem_limit_bytes=cfg["vmem"]),
    )(logits_2d, lse_2d)


# ------------------ fallback row-tiled log_softmax (no lse) ----------------

def _log_softmax_rows_kernel(logits_ref, out_ref, *, want_log):
    x = logits_ref[...].astype(jnp.float32)
    m = jnp.max(x, axis=-1, keepdims=True)
    s = x - m
    lse = jnp.log(jnp.sum(jnp.exp(s), axis=-1, keepdims=True))
    y = s - lse
    if not want_log:
        y = jnp.exp(y)
    out_ref[...] = y.astype(out_ref.dtype)


def log_softmax_rows(logits_2d, *, log_probs=True, out_dtype=jnp.float32):
    # TODO(synk): if tm*V f32 (x2 pipeline buffers) overflows the VMEM budget
    # for a huge vocab, switch to a two-pass / online-logsumexp over V tiles.
    M, V = logits_2d.shape
    cfg = _device_tiling()
    tm = _fit_tile(M, 512, 8)
    return pl.pallas_call(
        functools.partial(_log_softmax_rows_kernel, want_log=log_probs),
        out_shape=jax.ShapeDtypeStruct((M, V), out_dtype),
        grid_spec=pltpu.PrefetchScalarGridSpec(
            num_scalar_prefetch=0,
            grid=(M // tm,),
            in_specs=[pl.BlockSpec((tm, V), lambda i: (i, 0))],
            out_specs=pl.BlockSpec((tm, V), lambda i: (i, 0))),
        compiler_params=pltpu.CompilerParams(
            dimension_semantics=("parallel",),
            vmem_limit_bytes=cfg["vmem"]),
    )(logits_2d)


# ------------------------------ Decoder class ------------------------------

class FairseqDecoderPallas:
    """Minimal concrete FairseqDecoder with Pallas hot paths."""

    def __init__(self, vocab_size, embed_dim, key):
        k1, k2, k3 = jax.random.split(key, 3)
        self.vocab_size = vocab_size
        self.embed_dim = embed_dim
        # deterministic synthetic parameters (no checkpoint load)
        self.embed_tokens = 0.02 * jax.random.normal(
            k1, (vocab_size, embed_dim), jnp.float32)
        self.out_w = 0.02 * jax.random.normal(
            k2, (embed_dim, vocab_size), jnp.float32)
        self.out_b = 0.02 * jax.random.normal(
            k3, (1, vocab_size), jnp.float32)
        self.adaptive_softmax = None
        self.onnx_trace = False

    def extract_features(self, prev_output_tokens, encoder_out=None, **kwargs):
        # TODO(synk): base FairseqDecoder.extract_features is abstract; gather is
        # kept in plain JAX (folding it into the matmul via scalar-prefetch +
        # pl.Element row indexing is a minor win at real sizes).
        feats = jnp.take(self.embed_tokens, prev_output_tokens, axis=0)  # (B,T,D)
        return feats, {"encoder_out": encoder_out}

    def _project(self, features):
        B, T, D = features.shape
        logits2d, lse2d = fused_output_layer(
            features.reshape(B * T, D), self.out_w, self.out_b)
        return (logits2d.reshape(B, T, self.vocab_size),
                lse2d.reshape(B, T, 1))

    def output_layer(self, features, **kwargs):
        logits, _ = self._project(features)
        return logits

    def forward(self, prev_output_tokens, encoder_out=None, **kwargs):
        x, extra = self.extract_features(
            prev_output_tokens, encoder_out=encoder_out, **kwargs)
        logits, lse = self._project(x)
        extra["lse"] = lse          # model-specific output: fused log-sum-exp
        return logits, extra

    def get_normalized_probs(self, net_output, log_probs, sample=None,
                             two_stage=False, prev_tokens=None):
        # TODO(synk): two_stage scatter/sigmoid path and adaptive_softmax not
        # realized (adaptive_softmax is None in the base class; two_stage=False).
        logits = net_output[0]
        extra = net_output[1] if len(net_output) > 1 else None
        B, T, V = logits.shape
        logits2d = logits.reshape(B * T, V)
        if isinstance(extra, dict) and extra.get("lse") is not None:
            out2d = normalize_from_lse(
                logits2d, extra["lse"].reshape(B * T, 1), log_probs=log_probs)
        else:
            out2d = log_softmax_rows(logits2d, log_probs=log_probs)
        return out2d.reshape(B, T, V)

    def max_positions(self):
        return 1000000.0


# ---------------------------------- main -----------------------------------

if __name__ == "__main__":
    B, T, D, V = 2, 8, 32, 128
    dec = FairseqDecoderPallas(vocab_size=V, embed_dim=D,
                               key=jax.random.PRNGKey(0))
    tokens = jax.random.randint(jax.random.PRNGKey(1), (B, T), 0, V,
                                dtype=jnp.int32)

    logits, extra = dec.forward(tokens, encoder_out=None)
    lprobs = dec.get_normalized_probs((logits, extra), log_probs=True)
    probs = dec.get_normalized_probs((logits, extra), log_probs=False)
    lprobs_fb = dec.get_normalized_probs((logits, {}), log_probs=True)  # no lse
    jax.block_until_ready((logits, lprobs, probs, lprobs_fb))

    assert logits.shape == (B, T, V)
    assert lprobs.shape == (B, T, V)
    assert probs.shape == (B, T, V)

    # reference check in plain JAX (f32 everywhere; kernel uses bf16 MXU inputs
    # with f32 accumulation, so compare with a modest tolerance)
    ref_logits = jnp.take(dec.embed_tokens, tokens, axis=0) @ dec.out_w + dec.out_b
    ref_lprobs = jax.nn.log_softmax(ref_logits, axis=-1)

    assert jnp.allclose(logits, ref_logits, atol=1e-2), "logits mismatch"
    assert jnp.allclose(lprobs, ref_lprobs, atol=1e-2), "lprobs mismatch"
    assert jnp.allclose(probs, jnp.exp(ref_lprobs), atol=1e-3), "probs mismatch"
    assert jnp.allclose(lprobs_fb, ref_lprobs, atol=1e-2), "fallback mismatch"

    print("KERNEL_OK")
</pallas_src>

<mosaic_0001>
module attributes {stable_mosaic.version = 11 : i64} {
  func.func @_fused_logits_lse_kernel(%arg0: i32, %arg1: i32, %arg2: i32, %arg3: memref<16x32xbf16, #tpu.memory_space<vmem>>, %arg4: memref<32x128xbf16, #tpu.memory_space<vmem>>, %arg5: memref<1x128xf32, #tpu.memory_space<vmem>>, %arg6: memref<16x128xf32, #tpu.memory_space<vmem>>, %arg7: memref<16x1xf32, #tpu.memory_space<vmem>>, %arg8: memref<16x128xf32, #tpu.memory_space<vmem>>, %arg9: memref<16x1xf32, #tpu.memory_space<vmem>>, %arg10: memref<16x1xf32, #tpu.memory_space<vmem>>) attributes {dimension_semantics = [#tpu.dimension_semantics<parallel>, #tpu.dimension_semantics<arbitrary>, #tpu.dimension_semantics<arbitrary>], iteration_bounds = array<i64: 1, 1, 1>, scalar_prefetch = 0 : i64, scratch_operands = 3 : i64, tpu.core_type = #tpu.core_type<tc>, window_params = [{transform_indices = @transform_0, window_bounds = array<i64: 16, 32>}, {transform_indices = @transform_1, window_bounds = array<i64: 32, 128>}, {transform_indices = @transform_2, window_bounds = array<i64: 1, 128>}, {transform_indices = @transform_3, window_bounds = array<i64: 16, 128>}, {transform_indices = @transform_4, window_bounds = array<i64: 16, 1>}]} {
    %c0_i32 = arith.constant 0 : i32
    %0 = arith.cmpi eq, %arg1, %c0_i32 : i32
    %c0_i32_0 = arith.constant 0 : i32
    %1 = arith.cmpi eq, %arg2, %c0_i32_0 : i32
    %2 = arith.andi %0, %1 : i1
    %3 = arith.extui %2 : i1 to i32
    %c0_i32_1 = arith.constant 0 : i32
    %4 = arith.cmpi ne, %3, %c0_i32_1 : i32
    scf.if %4 {
      %cst_13 = arith.constant 0xFF800000 : f32
      %17 = vector.broadcast %cst_13 : f32 to vector<16x1xf32>
      %c0_14 = arith.constant 0 : index
      %c0_15 = arith.constant 0 : index
      %18 = vector.load %arg9[%c0_14, %c0_15] : memref<16x1xf32, #tpu.memory_space<vmem>>, vector<16x1xf32>
      tpu.vector_store %arg9[%c0_14, %c0_15], %17 {strides = array<i32>} : memref<16x1xf32, #tpu.memory_space<vmem>>, vector<16x1xf32>,
      %cst_16 = arith.constant 0.000000e+00 : f32
      %19 = vector.broadcast %cst_16 : f32 to vector<16x1xf32>
      %c0_17 = arith.constant 0 : index
      %c0_18 = arith.constant 0 : index
      %20 = vector.load %arg10[%c0_17, %c0_18] : memref<16x1xf32, #tpu.memory_space<vmem>>, vector<16x1xf32>
      tpu.vector_store %arg10[%c0_17, %c0_18], %19 {strides = array<i32>} : memref<16x1xf32, #tpu.memory_space<vmem>>, vector<16x1xf32>,
    } else {
    }
    %c0_i32_2 = arith.constant 0 : i32
    %5 = arith.cmpi eq, %arg2, %c0_i32_2 : i32
    %6 = arith.extui %5 : i1 to i32
    %c0_i32_3 = arith.constant 0 : i32
    %7 = arith.cmpi ne, %6, %c0_i32_3 : i32
    scf.if %7 {
      %cst_13 = arith.constant 0.000000e+00 : f32
      %17 = vector.broadcast %cst_13 : f32 to vector<16x128xf32>
      %c0_14 = arith.constant 0 : index
      %c0_15 = arith.constant 0 : index
      %18 = vector.load %arg8[%c0_14, %c0_15] : memref<16x128xf32, #tpu.memory_space<vmem>>, vector<16x128xf32>
      tpu.vector_store %arg8[%c0_14, %c0_15], %17 {strides = array<i32>} : memref<16x128xf32, #tpu.memory_space<vmem>>, vector<16x128xf32>,
    } else {
    }
    %c0 = arith.constant 0 : index
    %c0_4 = arith.constant 0 : index
    %8 = vector.load %arg8[%c0, %c0_4] : memref<16x128xf32, #tpu.memory_space<vmem>>, vector<16x128xf32>
    %c0_5 = arith.constant 0 : index
    %c0_6 = arith.constant 0 : index
    %9 = vector.load %arg3[%c0_5, %c0_6] : memref<16x32xbf16, #tpu.memory_space<vmem>>, vector<16x32xbf16>
    %c0_7 = arith.constant 0 : index
    %c0_8 = arith.constant 0 : index
    %10 = vector.load %arg4[%c0_7, %c0_8] : memref<32x128xbf16, #tpu.memory_space<vmem>>, vector<32x128xbf16>
    %cst = arith.constant dense<0.000000e+00> : vector<16x128xf32>
    %11 = tpu.matmul %9, %10, %cst {dimension_numbers = #tpu.dot_dimension_numbers<[1], [0], [0], [1], [0, 0, 1, 1], [], []>} : vector<16x32xbf16>, vector<32x128xbf16>, vector<16x128xf32> -> vector<16x128xf32>
    %12 = arith.addf %8, %11 : vector<16x128xf32>
    %c0_9 = arith.constant 0 : index
    %c0_10 = arith.constant 0 : index
    %13 = vector.load %arg8[%c0_9, %c0_10] : memref<16x128xf32, #tpu.memory_space<vmem>>, vector<16x128xf32>
    tpu.vector_store %arg8[%c0_9, %c0_10], %12 {strides = array<i32>} : memref<16x128xf32, #tpu.memory_space<vmem>>, vector<16x128xf32>,
    %c0_i32_11 = arith.constant 0 : i32
    %14 = arith.cmpi eq, %arg2, %c0_i32_11 : i32
    %15 = arith.extui %14 : i1 to i32
    %c0_i32_12 = arith.constant 0 : i32
    %16 = arith.cmpi ne, %15, %c0_i32_12 : i32
    scf.if %16 {
      %c0_13 = arith.constant 0 : index
      %c0_14 = arith.constant 0 : index
      %17 = vector.load %arg8[%c0_13, %c0_14] : memref<16x128xf32, #tpu.memory_space<vmem>>, vector<16x128xf32>
      %c0_15 = arith.constant 0 : index
      %c0_16 = arith.constant 0 : index
      %18 = vector.load %arg5[%c0_15, %c0_16] : memref<1x128xf32, #tpu.memory_space<vmem>>, vector<1x128xf32>
      %19 = vector.broadcast %18 : vector<1x128xf32> to vector<16x128xf32>
      %20 = arith.addf %17, %19 : vector<16x128xf32>
      %c0_17 = arith.constant 0 : index
      %c0_18 = arith.constant 0 : index
      %21 = vector.load %arg6[%c0_17, %c0_18] : memref<16x128xf32, #tpu.memory_space<vmem>>, vector<16x128xf32>
      tpu.vector_store %arg6[%c0_17, %c0_18], %20 {strides = array<i32>} : memref<16x128xf32, #tpu.memory_space<vmem>>, vector<16x128xf32>,
      %cst_19 = arith.constant dense<0xFF800000> : vector<16xf32>
      %22 = vector.multi_reduction <maximumf>, %20, %cst_19 [1] : vector<16x128xf32> to vector<16xf32>
      %23 = vector.shape_cast %22 : vector<16xf32> to vector<16x1xf32>
      %c0_20 = arith.constant 0 : index
      %c0_21 = arith.constant 0 : index
      %24 = vector.load %arg9[%c0_20, %c0_21] : memref<16x1xf32, #tpu.memory_space<vmem>>, vector<16x1xf32>
      %25 = arith.maximumf %24, %23 : vector<16x1xf32>
      %c0_22 = arith.constant 0 : index
      %c0_23 = arith.constant 0 : index
      %26 = vector.load %arg10[%c0_22, %c0_23] : memref<16x1xf32, #tpu.memory_space<vmem>>, vector<16x1xf32>
      %c0_24 = arith.constant 0 : index
      %c0_25 = arith.constant 0 : index
      %27 = vector.load %arg9[%c0_24, %c0_25] : memref<16x1xf32, #tpu.memory_space<vmem>>, vector<16x1xf32>
      %28 = arith.subf %27, %25 : vector<16x1xf32>
      %29 = math.exp %28 : vector<16x1xf32>
      %30 = arith.mulf %26, %29 : vector<16x1xf32>
      %31 = vector.broadcast %25 : vector<16x1xf32> to vector<16x128xf32>
      %32 = arith.subf %20, %31 : vector<16x128xf32>
      %33 = math.exp %32 : vector<16x128xf32>
      %cst_26 = arith.constant dense<0.000000e+00> : vector<16xf32>
      %34 = vector.multi_reduction <add>, %33, %cst_26 [1] : vector<16x128xf32> to vector<16xf32>
      %35 = vector.shape_cast %34 : vector<16xf32> to vector<16x1xf32>
      %36 = arith.addf %30, %35 : vector<16x1xf32>
      %c0_27 = arith.constant 0 : index
      %c0_28 = arith.constant 0 : index
      %37 = vector.load %arg10[%c0_27, %c0_28] : memref<16x1xf32, #tpu.memory_space<vmem>>, vector<16x1xf32>
      tpu.vector_store %arg10[%c0_27, %c0_28], %36 {strides = array<i32>} : memref<16x1xf32, #tpu.memory_space<vmem>>, vector<16x1xf32>,
      %c0_29 = arith.constant 0 : index
      %c0_30 = arith.constant 0 : index
      %38 = vector.load %arg9[%c0_29, %c0_30] : memref<16x1xf32, #tpu.memory_space<vmem>>, vector<16x1xf32>
      tpu.vector_store %arg9[%c0_29, %c0_30], %25 {strides = array<i32>} : memref<16x1xf32, #tpu.memory_space<vmem>>, vector<16x1xf32>,
      %c0_i32_31 = arith.constant 0 : i32
      %39 = arith.cmpi eq, %arg1, %c0_i32_31 : i32
      %40 = arith.extui %39 : i1 to i32
      %c0_i32_32 = arith.constant 0 : i32
      %41 = arith.cmpi ne, %40, %c0_i32_32 : i32
      scf.if %41 {
        %c0_33 = arith.constant 0 : index
        %c0_34 = arith.constant 0 : index
        %42 = vector.load %arg9[%c0_33, %c0_34] : memref<16x1xf32, #tpu.memory_space<vmem>>, vector<16x1xf32>
        %c0_35 = arith.constant 0 : index
        %c0_36 = arith.constant 0 : index
        %43 = vector.load %arg10[%c0_35, %c0_36] : memref<16x1xf32, #tpu.memory_space<vmem>>, vector<16x1xf32>
        %44 = math.log %43 : vector<16x1xf32>
        %45 = arith.addf %42, %44 : vector<16x1xf32>
        %c0_37 = arith.constant 0 : index
        %c0_38 = arith.constant 0 : index
        %46 = vector.load %arg7[%c0_37, %c0_38] : memref<16x1xf32, #tpu.memory_space<vmem>>, vector<16x1xf32>
        tpu.vector_store %arg7[%c0_37, %c0_38], %45 {strides = array<i32>} : memref<16x1xf32, #tpu.memory_space<vmem>>, vector<16x1xf32>,
      } else {
      }
    } else {
    }
    return
  }
  func.func @transform_0(%arg0: i32, %arg1: i32, %arg2: i32) -> (i32, i32) {
    %c0_i32 = arith.constant 0 : i32
    return %arg0, %arg2 : i32, i32
  }
  func.func @transform_1(%arg0: i32, %arg1: i32, %arg2: i32) -> (i32, i32) {
    %c0_i32 = arith.constant 0 : i32
    return %arg2, %arg1 : i32, i32
  }
  func.func @transform_2(%arg0: i32, %arg1: i32, %arg2: i32) -> (i32, i32) {
    %c0_i32 = arith.constant 0 : i32
    %c0_i32_0 = arith.constant 0 : i32
    return %c0_i32, %arg1 : i32, i32
  }
  func.func @transform_3(%arg0: i32, %arg1: i32, %arg2: i32) -> (i32, i32) {
    %c0_i32 = arith.constant 0 : i32
    return %arg0, %arg1 : i32, i32
  }
  func.func @transform_4(%arg0: i32, %arg1: i32, %arg2: i32) -> (i32, i32) {
    %c0_i32 = arith.constant 0 : i32
    %c0_i32_0 = arith.constant 0 : i32
    return %arg0, %c0_i32 : i32, i32
  }
}

</mosaic_0001>

<llo_original>
// kernel: tpu_custom_call.1
$region0: #{tpu_custom_call.1}
  #allocation0 [shape = 'u32[]', space=smem, size = 0x4, offset = 0x4, fixed_abs, tag = 'smem constant byte address 0x4 - core index']
  #allocation1 [shape = 'u32[144,128]{1,0:T(1,128)}', space=vmem, size = 0x12000, scoped, tag = 'internal scratch']
  #allocation2 [shape = 'f32[16,128]{1,0:T(8,128)}', space=vmem, size = 0x2000, scoped, tag = 'scratch operand']
  #allocation3 [shape = 'f32[16,1]{1,0:T(8,128)}', space=vmem, size = 0x2000, scoped, tag = 'scratch operand']
  #allocation4 [shape = 'f32[16,1]{1,0:T(8,128)}', space=vmem, size = 0x2000, scoped, tag = 'scratch operand']
  %s0 = inlined_call_operand.hbm [shape: bf16[16,32], index: 0, kind: input, shape index: {}]
  %s1 = inlined_call_operand.hbm [shape: bf16[32,128], index: 1, kind: input, shape index: {}]
  %s2 = inlined_call_operand.vmem [shape: f32[1,128], index: 2, kind: input, shape index: {}]
  %s3 = inlined_call_operand.hbm [shape: f32[16,128], index: 3, kind: output, shape index: {0}]
  %s4 = inlined_call_operand.vmem [shape: f32[16,1], index: 4, kind: output, shape index: {1}]
  %5 = xla_tuple %s3, %s4
  %s6 = sld [smem:[#allocation0]]
  $region54: #{tpu_custom_call.1} parent=0
    _
  %s8 = ssub.s32 1, %s6
  %s9 = scalar_select 0, %s8, %s6
  $region1: #{tpu_custom_call.1} parent=0
    #allocation5 [shape = 'u8[4096]{0}', space=vmem, size = 0x1000, scoped, tag = 'input window, operand 0, single buffered']
    #allocation6 [shape = 's32[1]{0}', space=sflag, size = 0x4, scoped, tag = 'scoped memory for tpu_custom_call.1']
    #allocation7 [shape = 's32[1]{0}', space=sflag, size = 0x4, scoped, tag = 'scoped memory for tpu_custom_call.1']
    #allocation8 [shape = 'u8[8192]{0}', space=vmem, size = 0x2000, scoped, tag = 'input window, operand 1, single buffered']
    #allocation9 [shape = 's32[1]{0}', space=sflag, size = 0x4, scoped, tag = 'scoped memory for tpu_custom_call.1']
    #allocation10 [shape = 'u8[8192]{0}', space=vmem, size = 0x2000, scoped, tag = 'output window, operand 0, single buffered']
    %10 = vsyncpa [#allocation6], 0
    %11 = vsyncpa [#allocation9], 0
    %12 = vsyncpa [#allocation7], 0
    // Predicated region
    $region2: #{tpu_custom_call.1} parent=1 // pred_check
      _
    $region3: #{tpu_custom_call.1} parent=1 // pred_check_branch
      %14 = sbr.rel (0) target = $region5
    $region4: #{tpu_custom_call.1} parent=1 // pred_region
      %s16 = ssub.s32 128, 128
      %17 = vsyncadd [#allocation6], %s16
      %s18 = sshll.u32 [#allocation5], 4
      %s19 = int_to_ptr.vmem [resolvable:$true] %s18
      %24 = dma.hbm_to_vmem [thread:$0]  %s0, 128, %s19, [#allocation6], 64, 64, 4
    $region5: #{tpu_custom_call.1} parent=1 // pred_fallthru
      _
    // Predicated region
    $region6: #{tpu_custom_call.1} parent=1 // pred_check
      _
    $region7: #{tpu_custom_call.1} parent=1 // pred_check_branch
      %26 = sbr.rel (0) target = $region9
    $region8: #{tpu_custom_call.1} parent=1 // pred_region
      %s28 = ssub.s32 256, 256
      %29 = vsyncadd [#allocation9], %s28
      %s30 = sshll.u32 [#allocation8], 4
      %s31 = int_to_ptr.vmem [resolvable:$true] %s30
      %36 = dma.hbm_to_vmem [thread:$0]  %s1, 256, %s31, [#allocation9], 64, 64, 4
    $region9: #{tpu_custom_call.1} parent=1 // pred_fallthru
      _
    // Predicated region
    $region10: #{tpu_custom_call.1} parent=1 // pred_check
      _
    $region11: #{tpu_custom_call.1} parent=1 // pred_check_branch
      %38 = sbr.rel (0) target = $region13
    $region12: #{tpu_custom_call.1} parent=1 // pred_region
      _
    $region13: #{tpu_custom_call.1} parent=1 // pred_fallthru
      _
    // Predicated region
    $region14: #{tpu_custom_call.1} parent=1 // pred_check
      _
    $region15: #{tpu_custom_call.1} parent=1 // pred_check_branch
      %40 = sbr.rel (0) target = $region17
    $region16: #{tpu_custom_call.1} parent=1 // pred_region
      %41 = dma.done [#allocation6], 128
    $region17: #{tpu_custom_call.1} parent=1 // pred_fallthru
      _
    // Predicated region
    $region18: #{tpu_custom_call.1} parent=1 // pred_check
      _
    $region19: #{tpu_custom_call.1} parent=1 // pred_check_branch
      %43 = sbr.rel (0) target = $region21
    $region20: #{tpu_custom_call.1} parent=1 // pred_region
      %44 = dma.done [#allocation9], 256
    $region21: #{tpu_custom_call.1} parent=1 // pred_fallthru
      _
    %p46 = scmp.eq.s32.totalorder 0, 0
    %p47 = scmp.eq.s32.totalorder 0, 0
    %p48 = pnand %p46, %p47
    %p49 = pneg %p48
    // Predicated region
    $region22: #{tpu_custom_call.1} parent=1 // pred_check
      _
    $region23: #{tpu_custom_call.1} parent=1 // pred_check_branch
      %51 = sbr.rel (%p48) target = $region25
    $region24: #{tpu_custom_call.1} parent=1 // pred_region
      %vm52 = vcmask 7168
      %53 = vst.msk [vmem:[#allocation3] sm:$0xff] %vm52, -inf
      %54 = vst.msk [vmem:[#allocation3 + $0x8] sm:$0xff] %vm52, -inf
      %55 = vst.msk [vmem:[#allocation4] sm:$0xff] %vm52, 0.0
      %56 = vst.msk [vmem:[#allocation4 + $0x8] sm:$0xff] %vm52, 0.0
    $region25: #{tpu_custom_call.1} parent=1 // pred_fallthru
      _
    // Predicated region
    $region26: #{tpu_custom_call.1} parent=1 // pred_check
      %p57 = pneg %p47
    $region27: #{tpu_custom_call.1} parent=1 // pred_check_branch
      %59 = sbr.rel (%p57) target = $region29
    $region28: #{tpu_custom_call.1} parent=1 // pred_region
      %60 = vst [vmem:[#allocation2] sm:$0xff] 0.0
      %61 = vst [vmem:[#allocation2 + $0x8] sm:$0xff] 0.0
    $region29: #{tpu_custom_call.1} parent=1 // pred_fallthru
      _
    %v62 = vld [vmem:[#allocation2] sm:$0xff]
    %v63 = vld [vmem:[#allocation2 + $0x8] sm:$0xff]
    %v64 = vld [vmem:[#allocation5] sm:$0xf]
    %v65 = vld [vmem:[#allocation5 + $0x4] sm:$0xf]
    %v66 = vld [vmem:[#allocation8] sm:$0xf]
    %v67 = vld [vmem:[#allocation8 + $0x4] sm:$0xf]
    %v68 = vld [vmem:[#allocation8 + $0x8] sm:$0xf]
    %v69 = vld [vmem:[#allocation8 + $0xc] sm:$0xf]
    %v72 = vunpack.c.l.b16 %v64
    %v73 = vunpack.c.l.b16 %v65
    %v74 = vpack.c.b16 %v73, %v72
    %v79 = vunpack.c.l.b16 %v66
    %v80 = vunpack.c.l.b16 %v67
    %v81 = vunpack.c.l.b16 %v68
    %v82 = vunpack.c.l.b16 %v69
    %v83 = vpack.c.b16 %v80, %v79
    %v84 = vpack.c.b16 %v82, %v81
    %vm87 = vcmask 261120
    %v89 = vsel %vm87, %v74, 0
    %91 = vmatprep.subr.bf16.mxu0 0
    %92 = vmatpush1.bf16.msra.mxu0 0
    %93 = vmatprep.subr.bf16.mxu0 0
    %94 = vmatpush1.bf16.msra.mxu0 0
    %95 = vmatprep.subr.bf16.mxu0 0
    %96 = vmatpush1.bf16.msra.mxu0 0
    %97 = vmatprep.subr.bf16.mxu0 0
    %98 = vmatpush1.bf16.msra.mxu0 0
    %99 = vmatprep.subr.bf16.mxu0 0
    %100 = vmatpush1.bf16.msra.mxu0 0
    %101 = vmatprep.subr.bf16.mxu0 0
    %102 = vmatpush1.bf16.msra.mxu0 0
    %103 = vmatprep.subr.bf16.mxu0 0
    %104 = vmatpush1.bf16.msra.mxu0 %v84
    %105 = vmatprep.subr.bf16.mxu0 0
    %106 = vmatpush1.bf16.msra.mxu0 %v83
    %107 = vmatprep.subr.bf16.mxu0 0
    %108 = vmatpush2.bf16.msra.mxu0 0
    %109 = vmatprep.subr.bf16.mxu0 0
    %110 = vmatpush2.bf16.msra.mxu0 0
    %111 = vmatprep.subr.bf16.mxu0 0
    %112 = vmatpush2.bf16.msra.mxu0 0
    %113 = vmatprep.subr.bf16.mxu0 0
    %114 = vmatpush2.bf16.msra.mxu0 0
    %115 = vmatprep.subr.bf16.mxu0 0
    %116 = vmatpush2.bf16.msra.mxu0 0
    %117 = vmatprep.subr.bf16.mxu0 0
    %118 = vmatpush2.bf16.msra.mxu0 0
    %119 = vmatprep.subr.bf16.mxu0 0
    %120 = vmatpush2.bf16.msra.mxu0 0
    %121 = vmatprep.subr.bf16.mxu0 0
    %122 = vmatpush2.bf16.msra.mxu0 0
    %123 = vmatprep.mubr.bf16.mxu0 0
    %124 = vmatmul.mubr.bf16.gmra.mxu0 %v89
    %v125 = vpop.f32.mrf.mxu0
    %v126 = vadd.f32 0.0, %v125
    %v127 = vpop.f32.mrf.mxu0
    %v128 = vpop.f32.mrf.mxu0
    %v129 = vadd.f32 0.0, %v128
    %v130 = vpop.f32.mrf.mxu0
    %131 = vdwg.mxu0
    %v132 = vadd.f32 %v62, %v126
    %v133 = vadd.f32 %v63, %v129
    %134 = vst [vmem:[#allocation2] sm:$0xff] %v132
    %135 = vst [vmem:[#allocation2 + $0x8] sm:$0xff] %v133
    // Predicated region
    $region30: #{tpu_custom_call.1} parent=1 // pred_check
      %p136 = pneg %p47
    $region31: #{tpu_custom_call.1} parent=1 // pred_check_branch
      %138 = sbr.rel (%p136) target = $region33
    $region32: #{tpu_custom_call.1} parent=1 // pred_region
      %v139 = vld [vmem:[#allocation2] sm:$0xff]
      %v140 = vld [vmem:[#allocation2 + $0x8] sm:$0xff]
      %v141 = vld [vmem:[%s2] sm:$0x1]
      %v143 = vlaneseq
      %v144 = vshrl.u32 %v143, 7
      %v145 = vsub.s32 0, %v144
      %v146 = vrot.slane %v141, %v145
      %v148 = vadd.f32 %v139, %v146
      %v149 = vadd.f32 %v140, %v146
      %150 = vst [vmem:[#allocation10] sm:$0xff] %v148
      %151 = vst [vmem:[#allocation10 + $0x8] sm:$0xff] %v149
      %152 = vmax.xlane.f32.xlu0 %v148
      %v153 = vpop.xlane.xlu0 %152
      %154 = vmax.xlane.f32.xlu0 %v149
      %v155 = vpop.xlane.xlu0 %154
      %v156 = vld [vmem:[#allocation3] sm:$0xff]
      %v157 = vld [vmem:[#allocation3 + $0x8] sm:$0xff]
      %v158 = vmax.f32 %v156, %v153
      %v159 = vmax.f32 %v157, %v155
      %v160 = vld [vmem:[#allocation4] sm:$0xff]
      %v161 = vld [vmem:[#allocation4 + $0x8] sm:$0xff]
      %v162 = vsub.f32 %v156, %v158
      %v163 = vsub.f32 %v157, %v159
      %v164 = vmul.f32 %v162, 1.442695
      %v165 = vpow.pop %v164
      %v166 = vmul.f32 %v163, 1.442695
      %v167 = vpow.pop %v166
      %v168 = vmul.f32 %v160, %v165
      %v169 = vmul.f32 %v161, %v167
      %171 = vset.pattern.permute.xlu0 0
      %172 = vperm.xlu0 %171, %v158
      %v173 = vpop.permute.xlu0 %172
      %176 = vset.pattern.permute.xlu0 0
      %177 = vperm.xlu0 %176, %v159
      %v178 = vpop.permute.xlu0 %177
      %v180 = vsub.f32 %v148, %v173
      %v181 = vsub.f32 %v149, %v178
      %v182 = vmul.f32 %v180, 1.442695
      %v183 = vpow.pop %v182
      %v184 = vmul.f32 %v181, 1.442695
      %v185 = vpow.pop %v184
      %186 = vadd.xlane.f32.xlu0 %v183
      %v187 = vpop.xlane.xlu0 %186
      %188 = vadd.xlane.f32.xlu0 %v185
      %v189 = vpop.xlane.xlu0 %188
      %v190 = vadd.f32 %v168, %v187
      %v191 = vadd.f32 %v169, %v189
      %vm192 = vcmask 7168
      %193 = vst.msk [vmem:[#allocation4] sm:$0xff] %vm192, %v190
      %194 = vst.msk [vmem:[#allocation4 + $0x8] sm:$0xff] %vm192, %v191
      %195 = vst.msk [vmem:[#allocation3] sm:$0xff] %vm192, %v158
      %196 = vst.msk [vmem:[#allocation3 + $0x8] sm:$0xff] %vm192, %v159
      // Predicated region
      $region34: #{tpu_custom_call.1} parent=32 // pred_check
        %p197 = pneg %p46
      $region35: #{tpu_custom_call.1} parent=32 // pred_check_branch
        %199 = sbr.rel (%p197) target = $region37
      $region36: #{tpu_custom_call.1} parent=32 // pred_region
        %v200 = vld [vmem:[#allocation3] sm:$0xff]
        %v201 = vld [vmem:[#allocation3 + $0x8] sm:$0xff]
        %v202 = vld [vmem:[#allocation4] sm:$0xff]
        %v203 = vld [vmem:[#allocation4 + $0x8] sm:$0xff]
        %v204 = vlog2.pop %v202
        %v205 = vmul.f32 %v204, 0.6931472
        %v206 = vlog2.pop %v203
        %v207 = vmul.f32 %v206, 0.6931472
        %v208 = vadd.f32 %v200, %v205
        %v209 = vadd.f32 %v201, %v207
        %210 = vst.msk [vmem:[%s4] sm:$0xff] %vm192, %v208
        %211 = vst.msk [vmem:[%s4 + $0x8] sm:$0xff] %vm192, %v209
      $region37: #{tpu_custom_call.1} parent=32 // pred_fallthru
        _
    $region33: #{tpu_custom_call.1} parent=1 // pred_fallthru
      _
    // Predicated region
    $region38: #{tpu_custom_call.1} parent=1 // pred_check
      _
    $region39: #{tpu_custom_call.1} parent=1 // pred_check_branch
      %213 = sbr.rel (0) target = $region41
    $region40: #{tpu_custom_call.1} parent=1 // pred_region
      %s215 = ssub.s32 256, 256
      %216 = vsyncadd [#allocation7], %s215
      %s217 = sshll.u32 [#allocation10], 4
      %s218 = int_to_ptr.vmem [resolvable:$true] %s217
      %223 = dma.vmem_to_hbm [thread:$0]  %s218, 256, %s3, [#allocation7], 128, 128, 8
    $region41: #{tpu_custom_call.1} parent=1 // pred_fallthru
      _
    // Predicated region
    $region42: #{tpu_custom_call.1} parent=1 // pred_check
      _
    $region43: #{tpu_custom_call.1} parent=1 // pred_check_branch
      %225 = sbr.rel (0) target = $region45
    $region44: #{tpu_custom_call.1} parent=1 // pred_region
      _
    $region45: #{tpu_custom_call.1} parent=1 // pred_fallthru
      _
    // Predicated region
    $region46: #{tpu_custom_call.1} parent=1 // pred_check
      _
    $region47: #{tpu_custom_call.1} parent=1 // pred_check_branch
      %227 = sbr.rel (0) target = $region49
    $region48: #{tpu_custom_call.1} parent=1 // pred_region
      %228 = dma.done [#allocation7], 256
    $region49: #{tpu_custom_call.1} parent=1 // pred_fallthru
      _
    // Predicated region
    $region50: #{tpu_custom_call.1} parent=1 // pred_check
      _
    $region51: #{tpu_custom_call.1} parent=1 // pred_check_branch
      %230 = sbr.rel (0) target = $region53
    $region52: #{tpu_custom_call.1} parent=1 // pred_region
      _
    $region53: #{tpu_custom_call.1} parent=1 // pred_fallthru
      _
    %231 = vsyncpa [#allocation6], 1
    %232 = vsyncpa [#allocation9], 1
    %233 = vsyncpa [#allocation7], 1

</llo_original>
